<compile_context>
chip_gen: v6e
topology: v6e:2x2x1
jax: 0.10.0
libtpu: 0.0.40
codegen_flags: <defaults>
</compile_context>

<pallas_src>
import functools

import jax
import jax.numpy as jnp
from jax.experimental import pallas as pl
from jax.experimental.pallas import tpu as pltpu


# ----------------------------------------------------------------------------
# helpers
# ----------------------------------------------------------------------------
def _round_up(x, m):
    return (x + m - 1) // m * m


@functools.lru_cache(maxsize=1)
def _mxu_tile_pref():
    """256-wide tiles on v6e/v7x (2x256x256 MXU), 128 on v5e and older chips."""
    try:
        kind = jax.devices()[0].device_kind.lower()
    except Exception:
        return 256
    if any(v in kind for v in ("v2", "v3", "v4", "v5")):
        return 128
    return 256


def _pick_tile(dim_p, pref, min_tiles=1):
    """dim_p is a multiple of 128. Pick the largest tile <= pref that divides it
    and, if possible, leaves >= min_tiles tiles (keeps both v7x TCs busy)."""
    t = pref
    while t > 128 and (dim_p % t != 0 or dim_p // t < min_tiles):
        t //= 2
    return min(t, dim_p)


def _apply_act(y, act):
    """Activation in f32.  Cheap mish: mish(y) = y*tanh(softplus(y)) = y*t/(t+2)
    with t = e^2 + 2e, e = exp(y)  ->  one EUP exp + one approx reciprocal."""
    if act == "mish":
        e = jnp.exp(jnp.minimum(y, 20.0))   # clamp: ratio already saturates to 1
        t = e * (e + 2.0)
        return y * t * pl.reciprocal(t + 2.0, approx=True)
    if act == "leaky":
        return jnp.where(y > 0, y, 0.1 * y)
    return y


# ----------------------------------------------------------------------------
# Kernel 1: tiled matmul + bias + activation (1x1 convs and im2col'd convs)
#   A (Mp, Kp) bf16  x  W (Kp, Np) bf16 (BN scale pre-folded)  + bias (1, Np) f32
# ----------------------------------------------------------------------------
def _mm_bias_act_kernel(a_ref, w_ref, b_ref, o_ref, acc_ref, *, act):
    k = pl.program_id(1)

    @pl.when(k == 0)
    def _():
        acc_ref[...] = jnp.zeros_like(acc_ref)

    acc_ref[...] += jnp.dot(a_ref[...], w_ref[...],
                            preferred_element_type=jnp.float32)

    @pl.when(k == pl.num_programs(1) - 1)
    def _():
        y = acc_ref[...] + b_ref[...]
        o_ref[...] = _apply_act(y, act).astype(o_ref.dtype)


def fused_matmul_bias_act(a, w_p, bias_p, act):
    """out = act(a @ w_p + bias_p).  w_p/bias_p are pre-padded; only a's M/K are
    padded here.  M is collapsed into a single tile (small at these shapes)."""
    M, K = a.shape
    Kp, Np = w_p.shape
    Mp = _round_up(M, 8)
    if Mp != M or Kp != K:
        a = jnp.pad(a, ((0, Mp - M), (0, Kp - K)))

    pref = _mxu_tile_pref()
    tn = _pick_tile(Np, pref, min_tiles=2)
    tk = _pick_tile(Kp, pref)
    grid = (Np // tn, Kp // tk)          # reduction axis last

    out = pl.pallas_call(
        functools.partial(_mm_bias_act_kernel, act=act),
        out_shape=jax.ShapeDtypeStruct((Mp, Np), jnp.bfloat16),
        grid_spec=pltpu.PrefetchScalarGridSpec(
            num_scalar_prefetch=0,
            grid=grid,
            in_specs=[
                pl.BlockSpec((Mp, tk), lambda j, k: (0, k)),
                pl.BlockSpec((tk, tn), lambda j, k: (k, j)),
                pl.BlockSpec((1, tn), lambda j, k: (0, j)),
            ],
            out_specs=pl.BlockSpec((Mp, tn), lambda j, k: (0, j)),
            scratch_shapes=[pltpu.VMEM((Mp, tn), jnp.float32)],
        ),
        compiler_params=pltpu.CompilerParams(
            dimension_semantics=("parallel", "arbitrary"),
            # actual working set ~2 MiB at 256-wide tiles; 32 MiB fits v7x's 64 MiB
            vmem_limit_bytes=32 * 1024 * 1024,
        ),
    )(a, w_p, bias_p)
    return out


# ----------------------------------------------------------------------------
# Kernel 2: fused 3x3 / stride-1 conv + bias + activation
#   Accumulates 9 shifted matmuls over a VMEM-resident padded input block,
#   avoiding the 9x im2col activation materialization in HBM.
# ----------------------------------------------------------------------------
def _conv3x3_s1_kernel(x_ref, w_ref, b_ref, o_ref, acc_ref, *, act):
    # x_ref: (1, H+2, W+2, Cin_p) bf16 ; w_ref: (9, Cin_p, tn) bf16
    # b_ref: (1, tn) f32              ; o_ref: (1, H, W, tn) bf16
    ho, wo = o_ref.shape[1], o_ref.shape[2]
    cin_p = x_ref.shape[3]
    acc_ref[...] = jnp.zeros_like(acc_ref)
    for t in range(9):
        dy, dx = t // 3, t % 3
        a = x_ref[0, dy:dy + ho, dx:dx + wo, :].reshape(ho * wo, cin_p)
        acc_ref[...] += jnp.dot(a, w_ref[t], preferred_element_type=jnp.float32)
    y = _apply_act(acc_ref[...] + b_ref[...], act)
    o_ref[...] = y.reshape(1, ho, wo, o_ref.shape[3]).astype(o_ref.dtype)


def conv3x3_s1_fused(x, w_taps, bias_p, act, cout):
    N, H, W, C = x.shape
    _, cin_p, nout_p = w_taps.shape
    xp = jnp.pad(x, ((0, 0), (1, 1), (1, 1), (0, cin_p - C)))
    tn = _pick_tile(nout_p, _mxu_tile_pref(), min_tiles=2)
    grid = (nout_p // tn, N)             # batch fastest -> W block fetched once per j

    out = pl.pallas_call(
        functools.partial(_conv3x3_s1_kernel, act=act),
        out_shape=jax.ShapeDtypeStruct((N, H, W, nout_p), jnp.bfloat16),
        grid_spec=pltpu.PrefetchScalarGridSpec(
            num_scalar_prefetch=0,
            grid=grid,
            in_specs=[
                pl.BlockSpec((1, H + 2, W + 2, cin_p), lambda j, n: (n, 0, 0, 0)),
                pl.BlockSpec((9, cin_p, tn), lambda j, n: (0, 0, j)),
                pl.BlockSpec((1, tn), lambda j, n: (0, j)),
            ],
            out_specs=pl.BlockSpec((1, H, W, tn), lambda j, n: (n, 0, 0, j)),
            scratch_shapes=[pltpu.VMEM((H * W, tn), jnp.float32)],
        ),
        compiler_params=pltpu.CompilerParams(
            dimension_semantics=("parallel", "parallel"),
            # actual working set ~6 MiB at 256-wide tiles; fits v7x's 64 MiB VMEM
            vmem_limit_bytes=32 * 1024 * 1024,
        ),
    )(xp, w_taps, bias_p)
    return out[..., :cout]


# ----------------------------------------------------------------------------
# ConvBNLayer: conv2d(no bias) + BN(eval, folded into W) + mish
# ----------------------------------------------------------------------------
def conv_bn(x, p, stride=1, act="mish"):
    """x: NHWC bf16.  p: prepared ConvBNLayer params (scale folded, pre-padded)."""
    ksize, cout = p["ksize"], p["cout"]
    N, H, W, C = x.shape
    if ksize == 1:
        a = x.reshape(N * H * W, C)
        y = fused_matmul_bias_act(a, p["w2d"], p["bias"], act)
        return y[:N * H * W, :cout].reshape(N, H, W, cout)

    # 3x3 conv
    if stride == 1 and W % 8 == 0:
        try:
            return conv3x3_s1_fused(x, p["w_taps"], p["bias"], act, cout)
        except Exception:
            pass  # fall back to the im2col path below if lowering fails

    # im2col path (stride-2 PAN route convs).  Tap order matches w_taps layout.
    cin_p = p["w_taps"].shape[1]
    xp = jnp.pad(x, ((0, 0), (1, 1), (1, 1), (0, cin_p - C)))
    Ho = (H + 2 - 3) // stride + 1
    Wo = (W + 2 - 3) // stride + 1
    cols = [xp[:, dy:dy + (Ho - 1) * stride + 1:stride,
               dx:dx + (Wo - 1) * stride + 1:stride, :]
            for dy in range(3) for dx in range(3)]
    a = jnp.concatenate(cols, axis=-1).reshape(N * Ho * Wo, 9 * cin_p)
    w2d = p["w_taps"].reshape(9 * cin_p, -1)
    y = fused_matmul_bias_act(a, w2d, p["bias"], act)
    return y[:N * Ho * Wo, :cout].reshape(N, Ho, Wo, cout)


def upsample2x(x):
    # F.interpolate(scale_factor=2.0), default mode='nearest'
    return jnp.repeat(jnp.repeat(x, 2, axis=1), 2, axis=2)


# ----------------------------------------------------------------------------
# Parameter construction (deterministic, synthetic) + one-time preparation
# ----------------------------------------------------------------------------
def _make_convbn_raw(key, cin, cout, ksize):
    kw, kg, kb, km, kv = jax.random.split(key, 5)
    fan = cin * ksize * ksize
    w = jax.random.normal(kw, (ksize, ksize, cin, cout), jnp.float32) / jnp.sqrt(
        jnp.asarray(fan, jnp.float32))
    gamma = 1.0 + 0.1 * jax.random.normal(kg, (cout,), jnp.float32)
    beta = 0.1 * jax.random.normal(kb, (cout,), jnp.float32)
    mean = 0.1 * jax.random.normal(km, (cout,), jnp.float32)
    var = 1.0 + 0.1 * jax.random.uniform(kv, (cout,), jnp.float32)
    eps = 1e-5
    scale = gamma / jnp.sqrt(var + eps)
    bias = beta - mean * scale
    return w, scale, bias


def _prepare_convbn(w, scale, bias):
    """Fold BN scale into W, pad K/N to 128 multiples, cast W to bf16 (once)."""
    ksize, _, cin, cout = w.shape
    wf = w * scale                       # fold BN scale into the conv weight
    cin_p, cout_p = _round_up(cin, 128), _round_up(cout, 128)
    bias_p = jnp.pad(bias, (0, cout_p - cout)).reshape(1, cout_p).astype(jnp.float32)
    p = dict(ksize=ksize, cin=cin, cout=cout, bias=bias_p)
    if ksize == 1:
        w2d = wf.reshape(cin, cout)
        p["w2d"] = jnp.pad(w2d, ((0, cin_p - cin),
                                 (0, cout_p - cout))).astype(jnp.bfloat16)
    else:
        wt = wf.reshape(ksize * ksize, cin, cout)   # tap-major, matches im2col order
        p["w_taps"] = jnp.pad(wt, ((0, 0), (0, cin_p - cin),
                                   (0, cout_p - cout))).astype(jnp.bfloat16)
    return p


def make_convbn(key, cin, cout, ksize):
    return _prepare_convbn(*_make_convbn_raw(key, cin, cout, ksize))


def make_csp(key, ch_in, ch_out, conv_block_num):
    keys = jax.random.split(key, 3 + 2 * conv_block_num)
    # conv1 and conv2 are 1x1 convs on the same input -> merge into one matmul
    w1, s1, b1 = _make_convbn_raw(keys[0], ch_in, ch_out, 1)
    w2, s2, b2 = _make_convbn_raw(keys[1], ch_in, ch_out, 1)
    conv12 = _prepare_convbn(jnp.concatenate([w1, w2], axis=-1),
                             jnp.concatenate([s1, s2]),
                             jnp.concatenate([b1, b2]))
    p = dict(
        conv12=conv12,
        split=ch_out,
        conv3=make_convbn(keys[2], ch_out * 2, ch_out * 2, 1),
        module=[],
    )
    for j in range(conv_block_num):
        p["module"].append(make_convbn(keys[3 + 2 * j], ch_out, ch_out, 1))
        p["module"].append(make_convbn(keys[4 + 2 * j], ch_out, ch_out, 3))
    return p


def build_ppyolopan_params(key, in_channels, conv_block_num):
    num_blocks = len(in_channels)
    params = dict(fpn=[], fpn_route=[], pan={}, pan_route={})
    fpn_channels = []
    keys = iter(jax.random.split(key, 8 * num_blocks + 8))

    # FPN part
    for i, ch_in in enumerate(in_channels[::-1]):
        if i > 0:
            ch_in += 512 // 2 ** (i - 1)
        channel = 512 // 2 ** i
        params["fpn"].append(make_csp(next(keys), ch_in, channel, conv_block_num))
        fpn_channels.append(channel * 2)
        if i < num_blocks - 1:
            params["fpn_route"].append(
                make_convbn(next(keys), channel * 2, channel, 1))

    # PAN part
    for i in reversed(range(num_blocks - 1)):
        params["pan_route"][i] = make_convbn(
            next(keys), fpn_channels[i + 1], fpn_channels[i + 1], 3)
        ch_in = fpn_channels[i] + fpn_channels[i + 1]
        channel = 512 // 2 ** i
        params["pan"][i] = make_csp(next(keys), ch_in, channel, conv_block_num)

    return params


# ----------------------------------------------------------------------------
# Forward pass (mirrors PPYOLOPAN.forward / PPYOLODetBlockCSP.forward)
# ----------------------------------------------------------------------------
def csp_forward(x, p, act="mish"):
    # conv1 || conv2 as one fused matmul, then split
    y12 = conv_bn(x, p["conv12"], act=act)
    left, right = y12[..., :p["split"]], y12[..., p["split"]:]
    for m in p["module"]:
        left = conv_bn(left, m, act=act)
    # TODO(synk): DropBlock omitted — identity when drop_block=False / eval mode.
    # TODO(synk): whole-CSP-chain VMEM-resident fusion (one pallas_call per block)
    # not implemented; each ConvBNLayer is its own fused kernel launch.
    y = jnp.concatenate([left, right], axis=-1)
    y = conv_bn(y, p["conv3"], act=act)
    return y, y


def ppyolopan_forward(params, blocks_nhwc, act="mish"):
    num_blocks = len(blocks_nhwc)
    blocks = blocks_nhwc[::-1]            # deepest first
    fpn_feats = []
    route = None
    for i, block in enumerate(blocks):
        if i > 0:
            block = jnp.concatenate([route, block], axis=-1)
        route, tip = csp_forward(block, params["fpn"][i], act)
        fpn_feats.append(tip)
        if i < num_blocks - 1:
            route = conv_bn(route, params["fpn_route"][i], act=act)
            route = upsample2x(route)

    pan_feats = [fpn_feats[-1]]
    route = fpn_feats[num_blocks - 1]
    for i in reversed(range(num_blocks - 1)):
        block = fpn_feats[i]
        route = conv_bn(route, params["pan_route"][i], stride=2, act=act)
        block = jnp.concatenate([route, block], axis=-1)
        route, tip = csp_forward(block, params["pan"][i], act)
        pan_feats.append(tip)
    return pan_feats[::-1]


# ----------------------------------------------------------------------------
if __name__ == "__main__":
    # Small synthetic config (defaults drop_block=False, spp=False, act='mish').
    in_channels = [32, 64]       # shallow -> deep
    conv_block_num = 1
    batch = 2

    key = jax.random.PRNGKey(0)
    k_params, k_x0, k_x1 = jax.random.split(key, 3)

    params = build_ppyolopan_params(k_params, in_channels, conv_block_num)

    # PyTorch-convention NCHW f32 inputs (shallow level has larger spatial).
    x0_nchw = jax.random.normal(k_x0, (batch, in_channels[0], 16, 16), jnp.float32)
    x1_nchw = jax.random.normal(k_x1, (batch, in_channels[1], 8, 8), jnp.float32)

    # NCHW f32 -> NHWC bf16 for the kernel layout / MXU path.
    blocks_nhwc = [jnp.transpose(x0_nchw, (0, 2, 3, 1)).astype(jnp.bfloat16),
                   jnp.transpose(x1_nchw, (0, 2, 3, 1)).astype(jnp.bfloat16)]

    outs_nhwc = ppyolopan_forward(params, blocks_nhwc, act="mish")
    # Back to NCHW f32 to match the PyTorch module's output convention.
    outs_nchw = [jnp.transpose(o.astype(jnp.float32), (0, 3, 1, 2))
                 for o in outs_nhwc]
    outs_nchw = [jax.block_until_ready(o) for o in outs_nchw]

    # Expected: [(2, 1024, 8, 8), (2, 512, 16, 16)] for this 2-level config.
    assert outs_nchw[0].shape == (batch, 1024, 8, 8), outs_nchw[0].shape
    assert outs_nchw[1].shape == (batch, 512, 16, 16), outs_nchw[1].shape
    assert all(bool(jnp.all(jnp.isfinite(o))) for o in outs_nchw)

    print("KERNEL_OK")
</pallas_src>

<mosaic_0001>
module attributes {stable_mosaic.version = 11 : i64} {
  func.func @_mm_bias_act_kernel(%arg0: i32, %arg1: i32, %arg2: memref<128x128xbf16, #tpu.memory_space<vmem>>, %arg3: memref<128x256xbf16, #tpu.memory_space<vmem>>, %arg4: memref<1x256xf32, #tpu.memory_space<vmem>>, %arg5: memref<128x256xbf16, #tpu.memory_space<vmem>>, %arg6: memref<128x256xf32, #tpu.memory_space<vmem>>) attributes {dimension_semantics = [#tpu.dimension_semantics<parallel>, #tpu.dimension_semantics<arbitrary>], iteration_bounds = array<i64: 4, 1>, scalar_prefetch = 0 : i64, scratch_operands = 1 : i64, tpu.core_type = #tpu.core_type<tc>, window_params = [{transform_indices = @transform_0, window_bounds = array<i64: 128, 128>}, {transform_indices = @transform_1, window_bounds = array<i64: 128, 256>}, {transform_indices = @transform_2, window_bounds = array<i64: 1, 256>}, {transform_indices = @transform_3, window_bounds = array<i64: 128, 256>}]} {
    %c0_i32 = arith.constant 0 : i32
    %0 = arith.cmpi eq, %arg1, %c0_i32 : i32
    %1 = arith.extui %0 : i1 to i32
    %c0_i32_0 = arith.constant 0 : i32
    %2 = arith.cmpi ne, %1, %c0_i32_0 : i32
    scf.if %2 {
      %cst_10 = arith.constant 0.000000e+00 : f32
      %12 = vector.broadcast %cst_10 : f32 to vector<128x256xf32>
      %c0_11 = arith.constant 0 : index
      %c0_12 = arith.constant 0 : index
      %13 = vector.load %arg6[%c0_11, %c0_12] : memref<128x256xf32, #tpu.memory_space<vmem>>, vector<128x256xf32>
      tpu.vector_store %arg6[%c0_11, %c0_12], %12 {strides = array<i32>} : memref<128x256xf32, #tpu.memory_space<vmem>>, vector<128x256xf32>,
    } else {
    }
    %c0 = arith.constant 0 : index
    %c0_1 = arith.constant 0 : index
    %3 = vector.load %arg6[%c0, %c0_1] : memref<128x256xf32, #tpu.memory_space<vmem>>, vector<128x256xf32>
    %c0_2 = arith.constant 0 : index
    %c0_3 = arith.constant 0 : index
    %4 = vector.load %arg2[%c0_2, %c0_3] : memref<128x128xbf16, #tpu.memory_space<vmem>>, vector<128x128xbf16>
    %c0_4 = arith.constant 0 : index
    %c0_5 = arith.constant 0 : index
    %5 = vector.load %arg3[%c0_4, %c0_5] : memref<128x256xbf16, #tpu.memory_space<vmem>>, vector<128x256xbf16>
    %cst = arith.constant dense<0.000000e+00> : vector<128x256xf32>
    %6 = tpu.matmul %4, %5, %cst {dimension_numbers = #tpu.dot_dimension_numbers<[1], [0], [0], [1], [0, 0, 1, 1], [], []>} : vector<128x128xbf16>, vector<128x256xbf16>, vector<128x256xf32> -> vector<128x256xf32>
    %7 = arith.addf %3, %6 : vector<128x256xf32>
    %c0_6 = arith.constant 0 : index
    %c0_7 = arith.constant 0 : index
    %8 = vector.load %arg6[%c0_6, %c0_7] : memref<128x256xf32, #tpu.memory_space<vmem>>, vector<128x256xf32>
    tpu.vector_store %arg6[%c0_6, %c0_7], %7 {strides = array<i32>} : memref<128x256xf32, #tpu.memory_space<vmem>>, vector<128x256xf32>,
    %c0_i32_8 = arith.constant 0 : i32
    %9 = arith.cmpi eq, %arg1, %c0_i32_8 : i32
    %10 = arith.extui %9 : i1 to i32
    %c0_i32_9 = arith.constant 0 : i32
    %11 = arith.cmpi ne, %10, %c0_i32_9 : i32
    scf.if %11 {
      %c0_10 = arith.constant 0 : index
      %c0_11 = arith.constant 0 : index
      %12 = vector.load %arg6[%c0_10, %c0_11] : memref<128x256xf32, #tpu.memory_space<vmem>>, vector<128x256xf32>
      %c0_12 = arith.constant 0 : index
      %c0_13 = arith.constant 0 : index
      %13 = vector.load %arg4[%c0_12, %c0_13] : memref<1x256xf32, #tpu.memory_space<vmem>>, vector<1x256xf32>
      %14 = vector.broadcast %13 : vector<1x256xf32> to vector<128x256xf32>
      %15 = arith.addf %12, %14 : vector<128x256xf32>
      %cst_14 = arith.constant 2.000000e+01 : f32
      %16 = vector.broadcast %cst_14 : f32 to vector<128x256xf32>
      %17 = arith.minimumf %15, %16 : vector<128x256xf32>
      %18 = math.exp %17 : vector<128x256xf32>
      %cst_15 = arith.constant 2.000000e+00 : f32
      %19 = vector.broadcast %cst_15 : f32 to vector<128x256xf32>
      %20 = arith.addf %18, %19 : vector<128x256xf32>
      %21 = arith.mulf %18, %20 : vector<128x256xf32>
      %22 = arith.mulf %15, %21 : vector<128x256xf32>
      %cst_16 = arith.constant 2.000000e+00 : f32
      %23 = vector.broadcast %cst_16 : f32 to vector<128x256xf32>
      %24 = arith.addf %21, %23 : vector<128x256xf32>
      %25 = tpu.reciprocal %24 {approx = true} : vector<128x256xf32> -> vector<128x256xf32>
      %26 = arith.mulf %22, %25 : vector<128x256xf32>
      %27 = arith.truncf %26 : vector<128x256xf32> to vector<128x256xbf16>
      %c0_17 = arith.constant 0 : index
      %c0_18 = arith.constant 0 : index
      %28 = vector.load %arg5[%c0_17, %c0_18] : memref<128x256xbf16, #tpu.memory_space<vmem>>, vector<128x256xbf16>
      tpu.vector_store %arg5[%c0_17, %c0_18], %27 {strides = array<i32>} : memref<128x256xbf16, #tpu.memory_space<vmem>>, vector<128x256xbf16>,
    } else {
    }
    return
  }
  func.func @transform_0(%arg0: i32, %arg1: i32) -> (i32, i32) {
    %c0_i32 = arith.constant 0 : i32
    %c0_i32_0 = arith.constant 0 : i32
    return %c0_i32, %arg1 : i32, i32
  }
  func.func @transform_1(%arg0: i32, %arg1: i32) -> (i32, i32) {
    %c0_i32 = arith.constant 0 : i32
    return %arg1, %arg0 : i32, i32
  }
  func.func @transform_2(%arg0: i32, %arg1: i32) -> (i32, i32) {
    %c0_i32 = arith.constant 0 : i32
    %c0_i32_0 = arith.constant 0 : i32
    return %c0_i32, %arg0 : i32, i32
  }
  func.func @transform_3(%arg0: i32, %arg1: i32) -> (i32, i32) {
    %c0_i32 = arith.constant 0 : i32
    %c0_i32_0 = arith.constant 0 : i32
    return %c0_i32, %arg0 : i32, i32
  }
}

</mosaic_0001>

<llo_original>
// kernel: tpu_custom_call.1
$region0: #{tpu_custom_call.1}
  #allocation0 [shape = 'u32[]', space=smem, size = 0x4, offset = 0x4, fixed_abs, tag = 'smem constant byte address 0x4 - core index']
  #allocation1 [shape = 'u32[144,128]{1,0:T(1,128)}', space=vmem, size = 0x12000, scoped, tag = 'internal scratch']
  #allocation2 [shape = 'f32[128,256]{1,0:T(8,128)}', space=vmem, size = 0x20000, scoped, tag = 'scratch operand']
  %s0 = inlined_call_operand.hbm [shape: bf16[128,128], index: 0, kind: input, shape index: {}]
  %s1 = inlined_call_operand.hbm [shape: bf16[128,1024], index: 1, kind: input, shape index: {}]
  %s2 = inlined_call_operand.hbm [shape: f32[1,1024], index: 2, kind: input, shape index: {}]
  %s3 = inlined_call_operand.hbm [shape: bf16[128,1024], index: 3, kind: output, shape index: {}]
  %s4 = sld [smem:[#allocation0]]
  $region65: #{tpu_custom_call.1} parent=0
    _
  %s6 = ssub.s32 1, %s4
  %s7 = scalar_select 0, %s6, %s4
  $region1: #{tpu_custom_call.1} parent=0
    #allocation3 [shape = 'u8[32768]{0}', space=vmem, size = 0x8000, scoped, tag = 'input window, operand 0, single buffered']
    #allocation4 [shape = 's32[2]{0}', space=sflag, size = 0x8, scoped, tag = 'scoped memory for tpu_custom_call.1']
    #allocation5 [shape = 's32[2]{0}', space=sflag, size = 0x8, scoped, tag = 'scoped memory for tpu_custom_call.1']
    #allocation6 [shape = 'u8[131072]{0}', space=vmem, size = 0x20000, scoped, tag = 'input window, operand 1']
    #allocation7 [shape = 's32[2]{0}', space=sflag, size = 0x8, scoped, tag = 'scoped memory for tpu_custom_call.1']
    #allocation8 [shape = 'u8[2048]{0}', space=vmem, size = 0x800, scoped, tag = 'input window, operand 2']
    #allocation9 [shape = 'u8[131072]{0}', space=vmem, size = 0x20000, scoped, tag = 'output window, operand 0']
    %8 = vsyncpa [#allocation4], 0
    %9 = vsyncpa [#allocation7], 0
    %s10 = scalar_lea.sflag [#allocation7], 1
    %11 = vsyncpa %s10, 0
    %12 = vsyncpa [#allocation5], 0
    %s13 = scalar_lea.sflag [#allocation5], 1
    %14 = vsyncpa %s13, 0
    loop: start=0, step=1, limit=6
    $region2: #{tpu_custom_call.1} parent=1 // loop_pre_header
      _
    $region3: #{tpu_custom_call.1} parent=1 // loop_header
      %s16 = sphi 0, %s20
      %p17 = scmp.ge.s32.totalorder %s16, 6
      %s23 = sphi 0, %s35
      %s24 = sphi 0, %s31
      %s25 = sphi 0, %s23
      %s26 = sphi 0, %s24
      %s27 = sphi 0, %s25
      %s28 = sphi 0, %s26
      %s38 = sphi 0, %s40
      %s41 = sphi 0, %s38
      %s42 = sphi 0, %s41
      %s58 = sphi 0, %s42
      %s66 = sphi 0, %s68
      %s69 = sphi 0, %s66
      %s70 = sphi 0, %s69
      %s86 = sphi 0, %s70
      %s92 = sphi 0, %s94
      %s95 = sphi 0, %s92
      %s96 = sphi 0, %s95
      %s112 = sphi 0, %s96
      %s118 = sphi 0, %s120
      %s121 = sphi 0, %s118
      %s122 = sphi 0, %s121
      %s138 = sphi 0, %s122
    $region4: #{tpu_custom_call.1} parent=1 // loop_header_branch
      %19 = sbr.rel (%p17) target = $region8
    $region5: #{tpu_custom_call.1} parent=1 // loop_body
      %s21 = ssub.s32 %s16, 1
      %s22 = ssub.s32 %s16, 2
      %s29 = sadd.s32 1, %s24
      %p30 = scmp.ge.s32.totalorder %s29, 1
      %s31 = scalar_select %p30, 0, %s29
      %s32 = sadd.s32 1, %s23
      %s33 = scalar_select %p30, %s32, %s23
      %p34 = scmp.ge.s32.totalorder %s33, 4
      %s35 = scalar_select %p34, 0, %s33
      %s36 = ssub.s32 %s24, %s31
      %p37 = scmp.eq.s32.totalorder %s36, 0
      %s39 = sadd.s32 %s38, 1
      %s40 = scalar_select %p37, %s38, %s39
      %p43 = pneg %p37
      %p44 = scmp.eq.s32.totalorder %s16, 3
      %p45 = por %p43, %p44
      %p46 = scmp.ne.s32.totalorder %s38, %s41
      %p47 = scmp.eq.s32.totalorder %s16, 0
      %p48 = por %p46, %p47
      %p49 = scmp.ne.s32.totalorder %s38, %s41
      %p50 = scmp.eq.s32.totalorder %s21, 3
      %p51 = por %p49, %p50
      %p52 = scmp.ne.s32.totalorder %s41, %s42
      %p53 = scmp.eq.s32.totalorder %s21, 0
      %p54 = por %p52, %p53
      %p55 = scmp.ne.s32.totalorder %s41, %s42
      %p56 = scmp.eq.s32.totalorder %s22, 3
      %p57 = por %p55, %p56
      %p59 = scmp.ne.s32.totalorder %s42, %s58
      %p60 = scmp.eq.s32.totalorder %s22, 0
      %p61 = por %p59, %p60
      %s62 = ssub.s32 %s24, %s31
      %s63 = ssub.s32 %s23, %s35
      %s64 = sor.u32 %s62, %s63
      %p65 = scmp.eq.s32.totalorder %s64, 0
      %s67 = sadd.s32 %s66, 1
      %s68 = scalar_select %p65, %s66, %s67
      %p71 = pneg %p65
      %p72 = scmp.eq.s32.totalorder %s16, 3
      %p73 = por %p71, %p72
      %p74 = scmp.ne.s32.totalorder %s66, %s69
      %p75 = scmp.eq.s32.totalorder %s16, 0
      %p76 = por %p74, %p75
      %p77 = scmp.ne.s32.totalorder %s66, %s69
      %p78 = scmp.eq.s32.totalorder %s21, 3
      %p79 = por %p77, %p78
      %p80 = scmp.ne.s32.totalorder %s69, %s70
      %p81 = scmp.eq.s32.totalorder %s21, 0
      %p82 = por %p80, %p81
      %p83 = scmp.ne.s32.totalorder %s69, %s70
      %p84 = scmp.eq.s32.totalorder %s22, 3
      %p85 = por %p83, %p84
      %p87 = scmp.ne.s32.totalorder %s70, %s86
      %p88 = scmp.eq.s32.totalorder %s22, 0
      %p89 = por %p87, %p88
      %s90 = ssub.s32 %s23, %s35
      %p91 = scmp.eq.s32.totalorder %s90, 0
      %s93 = sadd.s32 %s92, 1
      %s94 = scalar_select %p91, %s92, %s93
      %p97 = pneg %p91
      %p98 = scmp.eq.s32.totalorder %s16, 3
      %p99 = por %p97, %p98
      %p100 = scmp.ne.s32.totalorder %s92, %s95
      %p101 = scmp.eq.s32.totalorder %s16, 0
      %p102 = por %p100, %p101
      %p103 = scmp.ne.s32.totalorder %s92, %s95
      %p104 = scmp.eq.s32.totalorder %s21, 3
      %p105 = por %p103, %p104
      %p106 = scmp.ne.s32.totalorder %s95, %s96
      %p107 = scmp.eq.s32.totalorder %s21, 0
      %p108 = por %p106, %p107
      %p109 = scmp.ne.s32.totalorder %s95, %s96
      %p110 = scmp.eq.s32.totalorder %s22, 3
      %p111 = por %p109, %p110
      %p113 = scmp.ne.s32.totalorder %s96, %s112
      %p114 = scmp.eq.s32.totalorder %s22, 0
      %p115 = por %p113, %p114
      %s116 = ssub.s32 %s23, %s35
      %p117 = scmp.eq.s32.totalorder %s116, 0
      %s119 = sadd.s32 %s118, 1
      %s120 = scalar_select %p117, %s118, %s119
      %p123 = pneg %p117
      %p124 = scmp.eq.s32.totalorder %s16, 3
      %p125 = por %p123, %p124
      %p126 = scmp.ne.s32.totalorder %s118, %s121
      %p127 = scmp.eq.s32.totalorder %s16, 0
      %p128 = por %p126, %p127
      %p129 = scmp.ne.s32.totalorder %s118, %s121
      %p130 = scmp.eq.s32.totalorder %s21, 3
      %p131 = por %p129, %p130
      %p132 = scmp.ne.s32.totalorder %s121, %s122
      %p133 = scmp.eq.s32.totalorder %s21, 0
      %p134 = por %p132, %p133
      %p135 = scmp.ne.s32.totalorder %s121, %s122
      %p136 = scmp.eq.s32.totalorder %s22, 3
      %p137 = por %p135, %p136
      %p139 = scmp.ne.s32.totalorder %s122, %s138
      %p140 = scmp.eq.s32.totalorder %s22, 0
      %p141 = por %p139, %p140
      %p142 = scmp.le.s32.totalorder 1, %s16
      %p143 = scmp.lt.s32.totalorder %s16, 5
      %p144 = pnand %p142, %p143
      %p145 = pneg %p144
      // Predicated region
      $region9: #{tpu_custom_call.1} parent=5 // pred_check
        _
      $region10: #{tpu_custom_call.1} parent=5 // pred_check_branch
        %147 = sbr.rel (%p144) target = $region12
      $region11: #{tpu_custom_call.1} parent=5 // pred_region
        %s148 = ssub.s32 %s16, 1
        // Predicated region
        $region13: #{tpu_custom_call.1} parent=11 // pred_check
          %p149 = pneg %p54
        $region14: #{tpu_custom_call.1} parent=11 // pred_check_branch
          %151 = sbr.rel (%p149) target = $region16
        $region15: #{tpu_custom_call.1} parent=11 // pred_region
          %s153 = ssub.s32 1024, 1024
          %154 = vsyncadd [#allocation4], %s153
          %s155 = smul.addr %s26, 64
          %s156 = scalar_lea.hbm %s0, %s155
          %s157 = sshll.u32 [#allocation3], 4
          %s158 = int_to_ptr.vmem [resolvable:$true] %s157
          %163 = dma.hbm_to_vmem [thread:$0]  %s156, 1024, %s158, [#allocation4], 64, 64, 4
        $region16: #{tpu_custom_call.1} parent=11 // pred_fallthru
          _
      $region12: #{tpu_custom_call.1} parent=5 // pred_fallthru
        _
      %p164 = scmp.lt.s32.totalorder %s16, 4
      // Predicated region
      $region17: #{tpu_custom_call.1} parent=5 // pred_check
        %p165 = pneg %p164
      $region18: #{tpu_custom_call.1} parent=5 // pred_check_branch
        %167 = sbr.rel (%p165) target = $region20
      $region19: #{tpu_custom_call.1} parent=5 // pred_region
        // Predicated region
        $region21: #{tpu_custom_call.1} parent=19 // pred_check
          %p168 = pneg %p76
        $region22: #{tpu_custom_call.1} parent=19 // pred_check_branch
          %170 = sbr.rel (%p168) target = $region24
        $region23: #{tpu_custom_call.1} parent=19 // pred_region
          %s171 = sand.u32 %s16, 1
          %s172 = scalar_lea.sflag [#allocation7], %s171
          %s173 = sand.u32 %s66, 1
          %s174 = smul.addr %s173, 128
          %s175 = scalar_lea.vmem [#allocation6], %s174
          %s176 = smul.u32 16, %s24
          %s177 = smul.u32 2, %s23
          %s179 = ssub.s32 2048, 2048
          %180 = vsyncadd %s172, %s179
          %s181 = smul.addr %s176, 8
          %s182 = sadd.s32 %s177, %s181
          %s183 = smul.addr %s182, 64
          %s184 = scalar_lea.hbm %s1, %s183
          %s185 = sshll.u32 %s175, 4
          %s186 = int_to_ptr.vmem [resolvable:$true] %s185
          %191 = dma.hbm_to_vmem [thread:$0]  %s184, 2048, %s186, %s172, 512, 128, 8
        $region24: #{tpu_custom_call.1} parent=19 // pred_fallthru
          _
        // Predicated region
        $region25: #{tpu_custom_call.1} parent=19 // pred_check
          %p192 = pneg %p102
        $region26: #{tpu_custom_call.1} parent=19 // pred_check_branch
          %194 = sbr.rel (%p192) target = $region28
        $region27: #{tpu_custom_call.1} parent=19 // pred_region
          %s195 = sand.u32 %s16, 1
          %s196 = scalar_lea.sflag [#allocation7], %s195
          %s197 = sand.u32 %s92, 1
          %s198 = smul.addr %s197, 2
          %s199 = scalar_lea.vmem [#allocation8], %s198
          %s200 = smul.u32 2, %s23
          %s202 = ssub.s32 32, 32
          %203 = vsyncadd %s196, %s202
          %s204 = smul.addr %s200, 16
          %s205 = scalar_lea.hbm %s2, %s204
          %s207 = sshll.u32 %s199, 4
          %s208 = int_to_ptr.vmem [resolvable:$true] %s207
          %210 = dma.hbm_to_vmem [thread:$0]  %s205, 32, %s208, %s196
        $region28: #{tpu_custom_call.1} parent=19 // pred_fallthru
          _
      $region20: #{tpu_custom_call.1} parent=5 // pred_fallthru
        _
      %p211 = scmp.le.s32.totalorder 1, %s16
      %p212 = scmp.lt.s32.totalorder %s16, 5
      %p213 = pnand %p211, %p212
      %p214 = pneg %p213
      // Predicated region
      $region29: #{tpu_custom_call.1} parent=5 // pred_check
        _
      $region30: #{tpu_custom_call.1} parent=5 // pred_check_branch
        %216 = sbr.rel (%p213) target = $region32
      $region31: #{tpu_custom_call.1} parent=5 // pred_region
        %s217 = ssub.s32 %s16, 1
        // Predicated region
        $region33: #{tpu_custom_call.1} parent=31 // pred_check
          %p218 = pneg %p54
        $region34: #{tpu_custom_call.1} parent=31 // pred_check_branch
          %220 = sbr.rel (%p218) target = $region36
        $region35: #{tpu_custom_call.1} parent=31 // pred_region
          %221 = dma.done [#allocation4], 1024
        $region36: #{tpu_custom_call.1} parent=31 // pred_fallthru
          _
        %s222 = sand.u32 %s21, 1
        %s223 = scalar_lea.sflag [#allocation7], %s222
        %s224 = sand.u32 %s69, 1
        %s225 = smul.addr %s224, 128
        %s226 = scalar_lea.vmem [#allocation6], %s225
        // Predicated region
        $region37: #{tpu_custom_call.1} parent=31 // pred_check
          %p227 = pneg %p82
        $region38: #{tpu_custom_call.1} parent=31 // pred_check_branch
          %229 = sbr.rel (%p227) target = $region40
        $region39: #{tpu_custom_call.1} parent=31 // pred_region
          %230 = dma.done %s223, 2048
        $region40: #{tpu_custom_call.1} parent=31 // pred_fallthru
          _
        %s231 = sand.u32 %s21, 1
        %s232 = scalar_lea.sflag [#allocation7], %s231
        %s233 = sand.u32 %s95, 1
        %s234 = smul.addr %s233, 2
        %s235 = scalar_lea.vmem [#allocation8], %s234
        // Predicated region
        $region41: #{tpu_custom_call.1} parent=31 // pred_check
          %p236 = pneg %p108
        $region42: #{tpu_custom_call.1} parent=31 // pred_check_branch
          %238 = sbr.rel (%p236) target = $region44
        $region43: #{tpu_custom_call.1} parent=31 // pred_region
          %239 = dma.done %s232, 32
        $region44: #{tpu_custom_call.1} parent=31 // pred_fallthru
          _
        %p240 = pneg %p54
        %p241 = pneg %p51
        %s242 = sand.u32 %s21, 1
        %s243 = scalar_lea.sflag [#allocation7], %s242
        %s244 = sand.u32 %s69, 1
        %s245 = smul.addr %s244, 128
        %s246 = scalar_lea.vmem [#allocation6], %s245
        %p247 = pneg %p82
        %p248 = pneg %p79
        %s249 = sand.u32 %s21, 1
        %s250 = scalar_lea.sflag [#allocation7], %s249
        %s251 = sand.u32 %s95, 1
        %s252 = smul.addr %s251, 2
        %s253 = scalar_lea.vmem [#allocation8], %s252
        %p254 = pneg %p108
        %p255 = pneg %p105
        %p256 = pneg %p134
        %p257 = pneg %p131
        %s258 = sand.u32 %s121, 1
        %s259 = scalar_lea.sflag [#allocation5], %s258
        %s260 = sand.u32 %s121, 1
        %s261 = smul.addr %s260, 128
        %s262 = scalar_lea.vmem [#allocation9], %s261
        %s263 = smul.u32 16, %s26
        %s264 = smul.u32 2, %s25
        %s265 = smul.u32 2, %s25
        %s266 = smul.u32 2, %s25
        %p268 = scmp.eq.s32.totalorder %s26, 0
        // Predicated region
        $region45: #{tpu_custom_call.1} parent=31 // pred_check
          %p269 = pneg %p268
        $region46: #{tpu_custom_call.1} parent=31 // pred_check_branch
          %271 = sbr.rel (%p269) target = $region48
        $region47: #{tpu_custom_call.1} parent=31 // pred_region
          %272 = vst [vmem:[#allocation2] sm:$0xff] 0.0
          %273 = vst [vmem:[#allocation2 + $0x8] sm:$0xff] 0.0
          %274 = vst [vmem:[#allocation2 + $0x10] sm:$0xff] 0.0
          %275 = vst [vmem:[#allocation2 + $0x18] sm:$0xff] 0.0
          %276 = vst [vmem:[#allocation2 + $0x20] sm:$0xff] 0.0
          %277 = vst [vmem:[#allocation2 + $0x28] sm:$0xff] 0.0
          %278 = vst [vmem:[#allocation2 + $0x30] sm:$0xff] 0.0
          %279 = vst [vmem:[#allocation2 + $0x38] sm:$0xff] 0.0
          %280 = vst [vmem:[#allocation2 + $0x40] sm:$0xff] 0.0
          %281 = vst [vmem:[#allocation2 + $0x48] sm:$0xff] 0.0
          %282 = vst [vmem:[#allocation2 + $0x50] sm:$0xff] 0.0
          %283 = vst [vmem:[#allocation2 + $0x58] sm:$0xff] 0.0
          %284 = vst [vmem:[#allocation2 + $0x60] sm:$0xff] 0.0
          %285 = vst [vmem:[#allocation2 + $0x68] sm:$0xff] 0.0
          %286 = vst [vmem:[#allocation2 + $0x70] sm:$0xff] 0.0
          %287 = vst [vmem:[#allocation2 + $0x78] sm:$0xff] 0.0
          %288 = vst [vmem:[#allocation2 + $0x80] sm:$0xff] 0.0
          %289 = vst [vmem:[#allocation2 + $0x88] sm:$0xff] 0.0
          %290 = vst [vmem:[#allocation2 + $0x90] sm:$0xff] 0.0
          %291 = vst [vmem:[#allocation2 + $0x98] sm:$0xff] 0.0
          %292 = vst [vmem:[#allocation2 + $0xa0] sm:$0xff] 0.0
          %293 = vst [vmem:[#allocation2 + $0xa8] sm:$0xff] 0.0
          %294 = vst [vmem:[#allocation2 + $0xb0] sm:$0xff] 0.0
          %295 = vst [vmem:[#allocation2 + $0xb8] sm:$0xff] 0.0
          %296 = vst [vmem:[#allocation2 + $0xc0] sm:$0xff] 0.0
          %297 = vst [vmem:[#allocation2 + $0xc8] sm:$0xff] 0.0
          %298 = vst [vmem:[#allocation2 + $0xd0] sm:$0xff] 0.0
          %299 = vst [vmem:[#allocation2 + $0xd8] sm:$0xff] 0.0
          %300 = vst [vmem:[#allocation2 + $0xe0] sm:$0xff] 0.0
          %301 = vst [vmem:[#allocation2 + $0xe8] sm:$0xff] 0.0
          %302 = vst [vmem:[#allocation2 + $0xf0] sm:$0xff] 0.0
          %303 = vst [vmem:[#allocation2 + $0xf8] sm:$0xff] 0.0
        $region48: #{tpu_custom_call.1} parent=31 // pred_fallthru
          _
        %v304 = vld [vmem:[#allocation2] sm:$0xff]
        %v305 = vld [vmem:[#allocation2 + $0x8] sm:$0xff]
        %v306 = vld [vmem:[#allocation2 + $0x10] sm:$0xff]
        %v307 = vld [vmem:[#allocation2 + $0x18] sm:$0xff]
        %v308 = vld [vmem:[#allocation2 + $0x20] sm:$0xff]
        %v309 = vld [vmem:[#allocation2 + $0x28] sm:$0xff]
        %v310 = vld [vmem:[#allocation2 + $0x30] sm:$0xff]
        %v311 = vld [vmem:[#allocation2 + $0x38] sm:$0xff]
        %v312 = vld [vmem:[#allocation2 + $0x40] sm:$0xff]
        %v313 = vld [vmem:[#allocation2 + $0x48] sm:$0xff]
        %v314 = vld [vmem:[#allocation2 + $0x50] sm:$0xff]
        %v315 = vld [vmem:[#allocation2 + $0x58] sm:$0xff]
        %v316 = vld [vmem:[#allocation2 + $0x60] sm:$0xff]
        %v317 = vld [vmem:[#allocation2 + $0x68] sm:$0xff]
        %v318 = vld [vmem:[#allocation2 + $0x70] sm:$0xff]
        %v319 = vld [vmem:[#allocation2 + $0x78] sm:$0xff]
        %v320 = vld [vmem:[#allocation2 + $0x80] sm:$0xff]
        %v321 = vld [vmem:[#allocation2 + $0x88] sm:$0xff]
        %v322 = vld [vmem:[#allocation2 + $0x90] sm:$0xff]
        %v323 = vld [vmem:[#allocation2 + $0x98] sm:$0xff]
        %v324 = vld [vmem:[#allocation2 + $0xa0] sm:$0xff]
        %v325 = vld [vmem:[#allocation2 + $0xa8] sm:$0xff]
        %v326 = vld [vmem:[#allocation2 + $0xb0] sm:$0xff]
        %v327 = vld [vmem:[#allocation2 + $0xb8] sm:$0xff]
        %v328 = vld [vmem:[#allocation2 + $0xc0] sm:$0xff]
        %v329 = vld [vmem:[#allocation2 + $0xc8] sm:$0xff]
        %v330 = vld [vmem:[#allocation2 + $0xd0] sm:$0xff]
        %v331 = vld [vmem:[#allocation2 + $0xd8] sm:$0xff]
        %v332 = vld [vmem:[#allocation2 + $0xe0] sm:$0xff]
        %v333 = vld [vmem:[#allocation2 + $0xe8] sm:$0xff]
        %v334 = vld [vmem:[#allocation2 + $0xf0] sm:$0xff]
        %v335 = vld [vmem:[#allocation2 + $0xf8] sm:$0xff]
        %v336 = vld [vmem:[#allocation3] sm:$0xf]
        %v337 = vld [vmem:[#allocation3 + $0x4] sm:$0xf]
        %v338 = vld [vmem:[#allocation3 + $0x8] sm:$0xf]
        %v339 = vld [vmem:[#allocation3 + $0xc] sm:$0xf]
        %v340 = vld [vmem:[#allocation3 + $0x10] sm:$0xf]
        %v341 = vld [vmem:[#allocation3 + $0x14] sm:$0xf]
        %v342 = vld [vmem:[#allocation3 + $0x18] sm:$0xf]
        %v343 = vld [vmem:[#allocation3 + $0x1c] sm:$0xf]
        %v344 = vld [vmem:[#allocation3 + $0x20] sm:$0xf]
        %v345 = vld [vmem:[#allocation3 + $0x24] sm:$0xf]
        %v346 = vld [vmem:[#allocation3 + $0x28] sm:$0xf]
        %v347 = vld [vmem:[#allocation3 + $0x2c] sm:$0xf]
        %v348 = vld [vmem:[#allocation3 + $0x30] sm:$0xf]
        %v349 = vld [vmem:[#allocation3 + $0x34] sm:$0xf]
        %v350 = vld [vmem:[#allocation3 + $0x38] sm:$0xf]
        %v351 = vld [vmem:[#allocation3 + $0x3c] sm:$0xf]
        %v352 = vld [vmem:[%s226] sm:$0xff]
        %v353 = vld [vmem:[%s226 + $0x8] sm:$0xff]
        %v354 = vld [vmem:[%s226 + $0x10] sm:$0xff]
        %v355 = vld [vmem:[%s226 + $0x18] sm:$0xff]
        %v356 = vld [vmem:[%s226 + $0x20] sm:$0xff]
        %v357 = vld [vmem:[%s226 + $0x28] sm:$0xff]
        %v358 = vld [vmem:[%s226 + $0x30] sm:$0xff]
        %v359 = vld [vmem:[%s226 + $0x38] sm:$0xff]
        %v360 = vld [vmem:[%s226 + $0x40] sm:$0xff]
        %v361 = vld [vmem:[%s226 + $0x48] sm:$0xff]
        %v362 = vld [vmem:[%s226 + $0x50] sm:$0xff]
        %v363 = vld [vmem:[%s226 + $0x58] sm:$0xff]
        %v364 = vld [vmem:[%s226 + $0x60] sm:$0xff]
        %v365 = vld [vmem:[%s226 + $0x68] sm:$0xff]
        %v366 = vld [vmem:[%s226 + $0x70] sm:$0xff]
        %v367 = vld [vmem:[%s226 + $0x78] sm:$0xff]
        %v384 = vunpack.c.l.b16 %v336
        %v385 = vunpack.c.l.b16 %v337
        %v386 = vunpack.c.l.b16 %v338
        %v387 = vunpack.c.l.b16 %v339
        %v388 = vunpack.c.l.b16 %v340
        %v389 = vunpack.c.l.b16 %v341
        %v390 = vunpack.c.l.b16 %v342
        %v391 = vunpack.c.l.b16 %v343
        %v392 = vunpack.c.l.b16 %v344
        %v393 = vunpack.c.l.b16 %v345
        %v394 = vunpack.c.l.b16 %v346
        %v395 = vunpack.c.l.b16 %v347
        %v396 = vunpack.c.l.b16 %v348
        %v397 = vunpack.c.l.b16 %v349
        %v398 = vunpack.c.l.b16 %v350
        %v399 = vunpack.c.l.b16 %v351
        %v400 = vpack.c.b16 %v385, %v384
        %v401 = vpack.c.b16 %v387, %v386
        %v402 = vpack.c.b16 %v389, %v388
        %v403 = vpack.c.b16 %v391, %v390
        %v404 = vpack.c.b16 %v393, %v392
        %v405 = vpack.c.b16 %v395, %v394
        %v406 = vpack.c.b16 %v397, %v396
        %v407 = vpack.c.b16 %v399, %v398
        %v432 = vunpack.c.l.b16 %v352
        %v433 = vunpack.c.h.b16 %v352
        %v434 = vunpack.c.l.b16 %v353
        %v435 = vunpack.c.h.b16 %v353
        %v436 = vunpack.c.l.b16 %v354
        %v437 = vunpack.c.h.b16 %v354
        %v438 = vunpack.c.l.b16 %v355
        %v439 = vunpack.c.h.b16 %v355
        %v440 = vunpack.c.l.b16 %v356
        %v441 = vunpack.c.h.b16 %v356
        %v442 = vunpack.c.l.b16 %v357
        %v443 = vunpack.c.h.b16 %v357
        %v444 = vunpack.c.l.b16 %v358
        %v445 = vunpack.c.h.b16 %v358
        %v446 = vunpack.c.l.b16 %v359
        %v447 = vunpack.c.h.b16 %v359
        %v448 = vunpack.c.l.b16 %v360
        %v449 = vunpack.c.h.b16 %v360
        %v450 = vunpack.c.l.b16 %v361
        %v451 = vunpack.c.h.b16 %v361
        %v452 = vunpack.c.l.b16 %v362
        %v453 = vunpack.c.h.b16 %v362
        %v454 = vunpack.c.l.b16 %v363
        %v455 = vunpack.c.h.b16 %v363
        %v456 = vunpack.c.l.b16 %v364
        %v457 = vunpack.c.h.b16 %v364
        %v458 = vunpack.c.l.b16 %v365
        %v459 = vunpack.c.h.b16 %v365
        %v460 = vunpack.c.l.b16 %v366
        %v461 = vunpack.c.h.b16 %v366
        %v462 = vunpack.c.l.b16 %v367
        %v463 = vunpack.c.h.b16 %v367
        %v464 = vpack.c.b16 %v434, %v432
        %v465 = vpack.c.b16 %v435, %v433
        %v466 = vpack.c.b16 %v438, %v436
        %v467 = vpack.c.b16 %v439, %v437
        %v468 = vpack.c.b16 %v442, %v440
        %v469 = vpack.c.b16 %v443, %v441
        %v470 = vpack.c.b16 %v446, %v444
        %v471 = vpack.c.b16 %v447, %v445
        %v472 = vpack.c.b16 %v450, %v448
        %v473 = vpack.c.b16 %v451, %v449
        %v474 = vpack.c.b16 %v454, %v452
        %v475 = vpack.c.b16 %v455, %v453
        %v476 = vpack.c.b16 %v458, %v456
        %v477 = vpack.c.b16 %v459, %v457
        %v478 = vpack.c.b16 %v462, %v460
        %v479 = vpack.c.b16 %v463, %v461
        %496 = vmatprep.subr.bf16.mxu0 %v479
        %497 = vmatpush1.bf16.msra.mxu0 %v478
        %498 = vmatprep.subr.bf16.mxu0 %v477
        %499 = vmatpush1.bf16.msra.mxu0 %v476
        %500 = vmatprep.subr.bf16.mxu0 %v475
        %501 = vmatpush1.bf16.msra.mxu0 %v474
        %502 = vmatprep.subr.bf16.mxu0 %v473
        %503 = vmatpush1.bf16.msra.mxu0 %v472
        %504 = vmatprep.subr.bf16.mxu0 %v471
        %505 = vmatpush1.bf16.msra.mxu0 %v470
        %506 = vmatprep.subr.bf16.mxu0 %v469
        %507 = vmatpush1.bf16.msra.mxu0 %v468
        %508 = vmatprep.subr.bf16.mxu0 %v467
        %509 = vmatpush1.bf16.msra.mxu0 %v466
        %510 = vmatprep.subr.bf16.mxu0 %v465
        %511 = vmatpush1.bf16.msra.mxu0 %v464
        %512 = vmatprep.subr.bf16.mxu0 0
        %513 = vmatpush2.bf16.msra.mxu0 0
        %514 = vmatprep.subr.bf16.mxu0 0
        %515 = vmatpush2.bf16.msra.mxu0 0
        %516 = vmatprep.subr.bf16.mxu0 0
        %517 = vmatpush2.bf16.msra.mxu0 0
        %518 = vmatprep.subr.bf16.mxu0 0
        %519 = vmatpush2.bf16.msra.mxu0 0
        %520 = vmatprep.subr.bf16.mxu0 0
        %521 = vmatpush2.bf16.msra.mxu0 0
        %522 = vmatprep.subr.bf16.mxu0 0
        %523 = vmatpush2.bf16.msra.mxu0 0
        %524 = vmatprep.subr.bf16.mxu0 0
        %525 = vmatpush2.bf16.msra.mxu0 0
        %526 = vmatprep.subr.bf16.mxu0 0
        %527 = vmatpush2.bf16.msra.mxu0 0
        %528 = vmatprep.mubr.bf16.mxu0 0
        %529 = vmatmul.mubr.bf16.gmra.mxu0 %v400
        %v530 = vpop.f32.mrf.mxu0
        %v531 = vadd.f32 0.0, %v530
        %v532 = vpop.f32.mrf.mxu0
        %v533 = vadd.f32 0.0, %v532
        %v534 = vpop.f32.mrf.mxu0
        %v535 = vadd.f32 0.0, %v534
        %v536 = vpop.f32.mrf.mxu0
        %v537 = vadd.f32 0.0, %v536
        %538 = vmatprep.mubr.bf16.mxu0 0
        %539 = vmatmul.mubr.bf16.gmra.mxu0 %v401
        %v540 = vpop.f32.mrf.mxu0
        %v541 = vadd.f32 0.0, %v540
        %v542 = vpop.f32.mrf.mxu0
        %v543 = vadd.f32 0.0, %v542
        %v544 = vpop.f32.mrf.mxu0
        %v545 = vadd.f32 0.0, %v544
        %v546 = vpop.f32.mrf.mxu0
        %v547 = vadd.f32 0.0, %v546
        %548 = vmatprep.mubr.bf16.mxu0 0
        %549 = vmatmul.mubr.bf16.gmra.mxu0 %v402
        %v550 = vpop.f32.mrf.mxu0
        %v551 = vadd.f32 0.0, %v550
        %v552 = vpop.f32.mrf.mxu0
        %v553 = vadd.f32 0.0, %v552
        %v554 = vpop.f32.mrf.mxu0
        %v555 = vadd.f32 0.0, %v554
        %v556 = vpop.f32.mrf.mxu0
        %v557 = vadd.f32 0.0, %v556
        %558 = vmatprep.mubr.bf16.mxu0 0
        %559 = vmatmul.mubr.bf16.gmra.mxu0 %v403
        %v560 = vpop.f32.mrf.mxu0
        %v561 = vadd.f32 0.0, %v560
        %v562 = vpop.f32.mrf.mxu0
        %v563 = vadd.f32 0.0, %v562
        %v564 = vpop.f32.mrf.mxu0
        %v565 = vadd.f32 0.0, %v564
        %v566 = vpop.f32.mrf.mxu0
        %v567 = vadd.f32 0.0, %v566
        %568 = vmatprep.mubr.bf16.mxu0 0
        %569 = vmatmul.mubr.bf16.gmra.mxu0 %v404
        %v570 = vpop.f32.mrf.mxu0
        %v571 = vadd.f32 0.0, %v570
        %v572 = vpop.f32.mrf.mxu0
        %v573 = vadd.f32 0.0, %v572
        %v574 = vpop.f32.mrf.mxu0
        %v575 = vadd.f32 0.0, %v574
        %v576 = vpop.f32.mrf.mxu0
        %v577 = vadd.f32 0.0, %v576
        %578 = vmatprep.mubr.bf16.mxu0 0
        %579 = vmatmul.mubr.bf16.gmra.mxu0 %v405
        %v580 = vpop.f32.mrf.mxu0
        %v581 = vadd.f32 0.0, %v580
        %v582 = vpop.f32.mrf.mxu0
        %v583 = vadd.f32 0.0, %v582
        %v584 = vpop.f32.mrf.mxu0
        %v585 = vadd.f32 0.0, %v584
        %v586 = vpop.f32.mrf.mxu0
        %v587 = vadd.f32 0.0, %v586
        %588 = vmatprep.mubr.bf16.mxu0 0
        %589 = vmatmul.mubr.bf16.gmra.mxu0 %v406
        %v590 = vpop.f32.mrf.mxu0
        %v591 = vadd.f32 0.0, %v590
        %v592 = vpop.f32.mrf.mxu0
        %v593 = vadd.f32 0.0, %v592
        %v594 = vpop.f32.mrf.mxu0
        %v595 = vadd.f32 0.0, %v594
        %v596 = vpop.f32.mrf.mxu0
        %v597 = vadd.f32 0.0, %v596
        %598 = vmatprep.mubr.bf16.mxu0 0
        %599 = vmatmul.mubr.bf16.gmra.mxu0 %v407
        %v600 = vpop.f32.mrf.mxu0
        %v601 = vadd.f32 0.0, %v600
        %v602 = vpop.f32.mrf.mxu0
        %v603 = vadd.f32 0.0, %v602
        %v604 = vpop.f32.mrf.mxu0
        %v605 = vadd.f32 0.0, %v604
        %v606 = vpop.f32.mrf.mxu0
        %v607 = vadd.f32 0.0, %v606
        %608 = vdwg.mxu0
        %v609 = vadd.f32 %v304, %v531
        %v610 = vadd.f32 %v305, %v533
        %v611 = vadd.f32 %v306, %v535
        %v612 = vadd.f32 %v307, %v537
        %v613 = vadd.f32 %v308, %v541
        %v614 = vadd.f32 %v309, %v543
        %v615 = vadd.f32 %v310, %v545
        %v616 = vadd.f32 %v311, %v547
        %v617 = vadd.f32 %v312, %v551
        %v618 = vadd.f32 %v313, %v553
        %v619 = vadd.f32 %v314, %v555
        %v620 = vadd.f32 %v315, %v557
        %v621 = vadd.f32 %v316, %v561
        %v622 = vadd.f32 %v317, %v563
        %v623 = vadd.f32 %v318, %v565
        %v624 = vadd.f32 %v319, %v567
        %v625 = vadd.f32 %v320, %v571
        %v626 = vadd.f32 %v321, %v573
        %v627 = vadd.f32 %v322, %v575
        %v628 = vadd.f32 %v323, %v577
        %v629 = vadd.f32 %v324, %v581
        %v630 = vadd.f32 %v325, %v583
        %v631 = vadd.f32 %v326, %v585
        %v632 = vadd.f32 %v327, %v587
        %v633 = vadd.f32 %v328, %v591
        %v634 = vadd.f32 %v329, %v593
        %v635 = vadd.f32 %v330, %v595
        %v636 = vadd.f32 %v331, %v597
        %v637 = vadd.f32 %v332, %v601
        %v638 = vadd.f32 %v333, %v603
        %v639 = vadd.f32 %v334, %v605
        %v640 = vadd.f32 %v335, %v607
        %641 = vst [vmem:[#allocation2] sm:$0xff] %v609
        %642 = vst [vmem:[#allocation2 + $0x8] sm:$0xff] %v610
        %643 = vst [vmem:[#allocation2 + $0x10] sm:$0xff] %v611
        %644 = vst [vmem:[#allocation2 + $0x18] sm:$0xff] %v612
        %645 = vst [vmem:[#allocation2 + $0x20] sm:$0xff] %v613
        %646 = vst [vmem:[#allocation2 + $0x28] sm:$0xff] %v614
        %647 = vst [vmem:[#allocation2 + $0x30] sm:$0xff] %v615
        %648 = vst [vmem:[#allocation2 + $0x38] sm:$0xff] %v616
        %649 = vst [vmem:[#allocation2 + $0x40] sm:$0xff] %v617
        %650 = vst [vmem:[#allocation2 + $0x48] sm:$0xff] %v618
        %651 = vst [vmem:[#allocation2 + $0x50] sm:$0xff] %v619
        %652 = vst [vmem:[#allocation2 + $0x58] sm:$0xff] %v620
        %653 = vst [vmem:[#allocation2 + $0x60] sm:$0xff] %v621
        %654 = vst [vmem:[#allocation2 + $0x68] sm:$0xff] %v622
        %655 = vst [vmem:[#allocation2 + $0x70] sm:$0xff] %v623
        %656 = vst [vmem:[#allocation2 + $0x78] sm:$0xff] %v624
        %657 = vst [vmem:[#allocation2 + $0x80] sm:$0xff] %v625
        %658 = vst [vmem:[#allocation2 + $0x88] sm:$0xff] %v626
        %659 = vst [vmem:[#allocation2 + $0x90] sm:$0xff] %v627
        %660 = vst [vmem:[#allocation2 + $0x98] sm:$0xff] %v628
        %661 = vst [vmem:[#allocation2 + $0xa0] sm:$0xff] %v629
        %662 = vst [vmem:[#allocation2 + $0xa8] sm:$0xff] %v630
        %663 = vst [vmem:[#allocation2 + $0xb0] sm:$0xff] %v631
        %664 = vst [vmem:[#allocation2 + $0xb8] sm:$0xff] %v632
        %665 = vst [vmem:[#allocation2 + $0xc0] sm:$0xff] %v633
        %666 = vst [vmem:[#allocation2 + $0xc8] sm:$0xff] %v634
        %667 = vst [vmem:[#allocation2 + $0xd0] sm:$0xff] %v635
        %668 = vst [vmem:[#allocation2 + $0xd8] sm:$0xff] %v636
        %669 = vst [vmem:[#allocation2 + $0xe0] sm:$0xff] %v637
        %670 = vst [vmem:[#allocation2 + $0xe8] sm:$0xff] %v638
        %671 = vst [vmem:[#allocation2 + $0xf0] sm:$0xff] %v639
        %672 = vst [vmem:[#allocation2 + $0xf8] sm:$0xff] %v640
        // Predicated region
        $region49: #{tpu_custom_call.1} parent=31 // pred_check
          %p673 = pneg %p268
        $region50: #{tpu_custom_call.1} parent=31 // pred_check_branch
          %675 = sbr.rel (%p673) target = $region52
        $region51: #{tpu_custom_call.1} parent=31 // pred_region
          %v676 = vld [vmem:[#allocation2] sm:$0xff]
          %v677 = vld [vmem:[#allocation2 + $0x8] sm:$0xff]
          %v678 = vld [vmem:[#allocation2 + $0x10] sm:$0xff]
          %v679 = vld [vmem:[#allocation2 + $0x18] sm:$0xff]
          %v680 = vld [vmem:[#allocation2 + $0x20] sm:$0xff]
          %v681 = vld [vmem:[#allocation2 + $0x28] sm:$0xff]
          %v682 = vld [vmem:[#allocation2 + $0x30] sm:$0xff]
          %v683 = vld [vmem:[#allocation2 + $0x38] sm:$0xff]
          %v684 = vld [vmem:[#allocation2 + $0x40] sm:$0xff]
          %v685 = vld [vmem:[#allocation2 + $0x48] sm:$0xff]
          %v686 = vld [vmem:[#allocation2 + $0x50] sm:$0xff]
          %v687 = vld [vmem:[#allocation2 + $0x58] sm:$0xff]
          %v688 = vld [vmem:[#allocation2 + $0x60] sm:$0xff]
          %v689 = vld [vmem:[#allocation2 + $0x68] sm:$0xff]
          %v690 = vld [vmem:[#allocation2 + $0x70] sm:$0xff]
          %v691 = vld [vmem:[#allocation2 + $0x78] sm:$0xff]
          %v692 = vld [vmem:[#allocation2 + $0x80] sm:$0xff]
          %v693 = vld [vmem:[#allocation2 + $0x88] sm:$0xff]
          %v694 = vld [vmem:[#allocation2 + $0x90] sm:$0xff]
          %v695 = vld [vmem:[#allocation2 + $0x98] sm:$0xff]
          %v696 = vld [vmem:[#allocation2 + $0xa0] sm:$0xff]
          %v697 = vld [vmem:[#allocation2 + $0xa8] sm:$0xff]
          %v698 = vld [vmem:[#allocation2 + $0xb0] sm:$0xff]
          %v699 = vld [vmem:[#allocation2 + $0xb8] sm:$0xff]
          %v700 = vld [vmem:[#allocation2 + $0xc0] sm:$0xff]
          %v701 = vld [vmem:[#allocation2 + $0xc8] sm:$0xff]
          %v702 = vld [vmem:[#allocation2 + $0xd0] sm:$0xff]
          %v703 = vld [vmem:[#allocation2 + $0xd8] sm:$0xff]
          %v704 = vld [vmem:[#allocation2 + $0xe0] sm:$0xff]
          %v705 = vld [vmem:[#allocation2 + $0xe8] sm:$0xff]
          %v706 = vld [vmem:[#allocation2 + $0xf0] sm:$0xff]
          %v707 = vld [vmem:[#allocation2 + $0xf8] sm:$0xff]
          %v708 = vld [vmem:[%s235] sm:$0x3]
          %v710 = vlaneseq
          %v711 = vshrl.u32 %v710, 7
          %v712 = vsub.s32 0, %v711
          %v713 = vrot.slane %v708, %v712
          %v714 = vlaneseq
          %v715 = vshrl.u32 %v714, 7
          %v716 = vsub.s32 1, %v715
          %v717 = vrot.slane %v708, %v716
          %v720 = vadd.f32 %v676, %v713
          %v721 = vadd.f32 %v677, %v717
          %v722 = vadd.f32 %v678, %v713
          %v723 = vadd.f32 %v679, %v717
          %v724 = vadd.f32 %v680, %v713
          %v725 = vadd.f32 %v681, %v717
          %v726 = vadd.f32 %v682, %v713
          %v727 = vadd.f32 %v683, %v717
          %v728 = vadd.f32 %v684, %v713
          %v729 = vadd.f32 %v685, %v717
          %v730 = vadd.f32 %v686, %v713
          %v731 = vadd.f32 %v687, %v717
          %v732 = vadd.f32 %v688, %v713
          %v733 = vadd.f32 %v689, %v717
          %v734 = vadd.f32 %v690, %v713
          %v735 = vadd.f32 %v691, %v717
          %v736 = vadd.f32 %v692, %v713
          %v737 = vadd.f32 %v693, %v717
          %v738 = vadd.f32 %v694, %v713
          %v739 = vadd.f32 %v695, %v717
          %v740 = vadd.f32 %v696, %v713
          %v741 = vadd.f32 %v697, %v717
          %v742 = vadd.f32 %v698, %v713
          %v743 = vadd.f32 %v699, %v717
          %v744 = vadd.f32 %v700, %v713
          %v745 = vadd.f32 %v701, %v717
          %v746 = vadd.f32 %v702, %v713
          %v747 = vadd.f32 %v703, %v717
          %v748 = vadd.f32 %v704, %v713
          %v749 = vadd.f32 %v705, %v717
          %v750 = vadd.f32 %v706, %v713
          %v751 = vadd.f32 %v707, %v717
          %v752 = vmin.f32 %v720, 20.0
          %v753 = vmin.f32 %v721, 20.0
          %v754 = vmin.f32 %v722, 20.0
          %v755 = vmin.f32 %v723, 20.0
          %v756 = vmin.f32 %v724, 20.0
          %v757 = vmin.f32 %v725, 20.0
          %v758 = vmin.f32 %v726, 20.0
          %v759 = vmin.f32 %v727, 20.0
          %v760 = vmin.f32 %v728, 20.0
          %v761 = vmin.f32 %v729, 20.0
          %v762 = vmin.f32 %v730, 20.0
          %v763 = vmin.f32 %v731, 20.0
          %v764 = vmin.f32 %v732, 20.0
          %v765 = vmin.f32 %v733, 20.0
          %v766 = vmin.f32 %v734, 20.0
          %v767 = vmin.f32 %v735, 20.0
          %v768 = vmin.f32 %v736, 20.0
          %v769 = vmin.f32 %v737, 20.0
          %v770 = vmin.f32 %v738, 20.0
          %v771 = vmin.f32 %v739, 20.0
          %v772 = vmin.f32 %v740, 20.0
          %v773 = vmin.f32 %v741, 20.0
          %v774 = vmin.f32 %v742, 20.0
          %v775 = vmin.f32 %v743, 20.0
          %v776 = vmin.f32 %v744, 20.0
          %v777 = vmin.f32 %v745, 20.0
          %v778 = vmin.f32 %v746, 20.0
          %v779 = vmin.f32 %v747, 20.0
          %v780 = vmin.f32 %v748, 20.0
          %v781 = vmin.f32 %v749, 20.0
          %v782 = vmin.f32 %v750, 20.0
          %v783 = vmin.f32 %v751, 20.0
          %v784 = vmul.f32 %v752, 1.442695
          %v785 = vpow.pop %v784
          %v786 = vmul.f32 %v753, 1.442695
          %v787 = vpow.pop %v786
          %v788 = vmul.f32 %v754, 1.442695
          %v789 = vpow.pop %v788
          %v790 = vmul.f32 %v755, 1.442695
          %v791 = vpow.pop %v790
          %v792 = vmul.f32 %v756, 1.442695
          %v793 = vpow.pop %v792
          %v794 = vmul.f32 %v757, 1.442695
          %v795 = vpow.pop %v794
          %v796 = vmul.f32 %v758, 1.442695
          %v797 = vpow.pop %v796
          %v798 = vmul.f32 %v759, 1.442695
          %v799 = vpow.pop %v798
          %v800 = vmul.f32 %v760, 1.442695
          %v801 = vpow.pop %v800
          %v802 = vmul.f32 %v761, 1.442695
          %v803 = vpow.pop %v802
          %v804 = vmul.f32 %v762, 1.442695
          %v805 = vpow.pop %v804
          %v806 = vmul.f32 %v763, 1.442695
          %v807 = vpow.pop %v806
          %v808 = vmul.f32 %v764, 1.442695
          %v809 = vpow.pop %v808
          %v810 = vmul.f32 %v765, 1.442695
          %v811 = vpow.pop %v810
          %v812 = vmul.f32 %v766, 1.442695
          %v813 = vpow.pop %v812
          %v814 = vmul.f32 %v767, 1.442695
          %v815 = vpow.pop %v814
          %v816 = vmul.f32 %v768, 1.442695
          %v817 = vpow.pop %v816
          %v818 = vmul.f32 %v769, 1.442695
          %v819 = vpow.pop %v818
          %v820 = vmul.f32 %v770, 1.442695
          %v821 = vpow.pop %v820
          %v822 = vmul.f32 %v771, 1.442695
          %v823 = vpow.pop %v822
          %v824 = vmul.f32 %v772, 1.442695
          %v825 = vpow.pop %v824
          %v826 = vmul.f32 %v773, 1.442695
          %v827 = vpow.pop %v826
          %v828 = vmul.f32 %v774, 1.442695
          %v829 = vpow.pop %v828
          %v830 = vmul.f32 %v775, 1.442695
          %v831 = vpow.pop %v830
          %v832 = vmul.f32 %v776, 1.442695
          %v833 = vpow.pop %v832
          %v834 = vmul.f32 %v777, 1.442695
          %v835 = vpow.pop %v834
          %v836 = vmul.f32 %v778, 1.442695
          %v837 = vpow.pop %v836
          %v838 = vmul.f32 %v779, 1.442695
          %v839 = vpow.pop %v838
          %v840 = vmul.f32 %v780, 1.442695
          %v841 = vpow.pop %v840
          %v842 = vmul.f32 %v781, 1.442695
          %v843 = vpow.pop %v842
          %v844 = vmul.f32 %v782, 1.442695
          %v845 = vpow.pop %v844
          %v846 = vmul.f32 %v783, 1.442695
          %v847 = vpow.pop %v846
          %v848 = vadd.f32 %v785, 2.0
          %v849 = vadd.f32 %v787, 2.0
          %v850 = vadd.f32 %v789, 2.0
          %v851 = vadd.f32 %v791, 2.0
          %v852 = vadd.f32 %v793, 2.0
          %v853 = vadd.f32 %v795, 2.0
          %v854 = vadd.f32 %v797, 2.0
          %v855 = vadd.f32 %v799, 2.0
          %v856 = vadd.f32 %v801, 2.0
          %v857 = vadd.f32 %v803, 2.0
          %v858 = vadd.f32 %v805, 2.0
          %v859 = vadd.f32 %v807, 2.0
          %v860 = vadd.f32 %v809, 2.0
          %v861 = vadd.f32 %v811, 2.0
          %v862 = vadd.f32 %v813, 2.0
          %v863 = vadd.f32 %v815, 2.0
          %v864 = vadd.f32 %v817, 2.0
          %v865 = vadd.f32 %v819, 2.0
          %v866 = vadd.f32 %v821, 2.0
          %v867 = vadd.f32 %v823, 2.0
          %v868 = vadd.f32 %v825, 2.0
          %v869 = vadd.f32 %v827, 2.0
          %v870 = vadd.f32 %v829, 2.0
          %v871 = vadd.f32 %v831, 2.0
          %v872 = vadd.f32 %v833, 2.0
          %v873 = vadd.f32 %v835, 2.0
          %v874 = vadd.f32 %v837, 2.0
          %v875 = vadd.f32 %v839, 2.0
          %v876 = vadd.f32 %v841, 2.0
          %v877 = vadd.f32 %v843, 2.0
          %v878 = vadd.f32 %v845, 2.0
          %v879 = vadd.f32 %v847, 2.0
          %v880 = vmul.f32 %v785, %v848
          %v881 = vmul.f32 %v787, %v849
          %v882 = vmul.f32 %v789, %v850
          %v883 = vmul.f32 %v791, %v851
          %v884 = vmul.f32 %v793, %v852
          %v885 = vmul.f32 %v795, %v853
          %v886 = vmul.f32 %v797, %v854
          %v887 = vmul.f32 %v799, %v855
          %v888 = vmul.f32 %v801, %v856
          %v889 = vmul.f32 %v803, %v857
          %v890 = vmul.f32 %v805, %v858
          %v891 = vmul.f32 %v807, %v859
          %v892 = vmul.f32 %v809, %v860
          %v893 = vmul.f32 %v811, %v861
          %v894 = vmul.f32 %v813, %v862
          %v895 = vmul.f32 %v815, %v863
          %v896 = vmul.f32 %v817, %v864
          %v897 = vmul.f32 %v819, %v865
          %v898 = vmul.f32 %v821, %v866
          %v899 = vmul.f32 %v823, %v867
          %v900 = vmul.f32 %v825, %v868
          %v901 = vmul.f32 %v827, %v869
          %v902 = vmul.f32 %v829, %v870
          %v903 = vmul.f32 %v831, %v871
          %v904 = vmul.f32 %v833, %v872
          %v905 = vmul.f32 %v835, %v873
          %v906 = vmul.f32 %v837, %v874
          %v907 = vmul.f32 %v839, %v875
          %v908 = vmul.f32 %v841, %v876
          %v909 = vmul.f32 %v843, %v877
          %v910 = vmul.f32 %v845, %v878
          %v911 = vmul.f32 %v847, %v879
          %v912 = vmul.f32 %v720, %v880
          %v913 = vmul.f32 %v721, %v881
          %v914 = vmul.f32 %v722, %v882
          %v915 = vmul.f32 %v723, %v883
          %v916 = vmul.f32 %v724, %v884
          %v917 = vmul.f32 %v725, %v885
          %v918 = vmul.f32 %v726, %v886
          %v919 = vmul.f32 %v727, %v887
          %v920 = vmul.f32 %v728, %v888
          %v921 = vmul.f32 %v729, %v889
          %v922 = vmul.f32 %v730, %v890
          %v923 = vmul.f32 %v731, %v891
          %v924 = vmul.f32 %v732, %v892
          %v925 = vmul.f32 %v733, %v893
          %v926 = vmul.f32 %v734, %v894
          %v927 = vmul.f32 %v735, %v895
          %v928 = vmul.f32 %v736, %v896
          %v929 = vmul.f32 %v737, %v897
          %v930 = vmul.f32 %v738, %v898
          %v931 = vmul.f32 %v739, %v899
          %v932 = vmul.f32 %v740, %v900
          %v933 = vmul.f32 %v741, %v901
          %v934 = vmul.f32 %v742, %v902
          %v935 = vmul.f32 %v743, %v903
          %v936 = vmul.f32 %v744, %v904
          %v937 = vmul.f32 %v745, %v905
          %v938 = vmul.f32 %v746, %v906
          %v939 = vmul.f32 %v747, %v907
          %v940 = vmul.f32 %v748, %v908
          %v941 = vmul.f32 %v749, %v909
          %v942 = vmul.f32 %v750, %v910
          %v943 = vmul.f32 %v751, %v911
          %v944 = vadd.f32 %v880, 2.0
          %v945 = vadd.f32 %v881, 2.0
          %v946 = vadd.f32 %v882, 2.0
          %v947 = vadd.f32 %v883, 2.0
          %v948 = vadd.f32 %v884, 2.0
          %v949 = vadd.f32 %v885, 2.0
          %v950 = vadd.f32 %v886, 2.0
          %v951 = vadd.f32 %v887, 2.0
          %v952 = vadd.f32 %v888, 2.0
          %v953 = vadd.f32 %v889, 2.0
          %v954 = vadd.f32 %v890, 2.0
          %v955 = vadd.f32 %v891, 2.0
          %v956 = vadd.f32 %v892, 2.0
          %v957 = vadd.f32 %v893, 2.0
          %v958 = vadd.f32 %v894, 2.0
          %v959 = vadd.f32 %v895, 2.0
          %v960 = vadd.f32 %v896, 2.0
          %v961 = vadd.f32 %v897, 2.0
          %v962 = vadd.f32 %v898, 2.0
          %v963 = vadd.f32 %v899, 2.0
          %v964 = vadd.f32 %v900, 2.0
          %v965 = vadd.f32 %v901, 2.0
          %v966 = vadd.f32 %v902, 2.0
          %v967 = vadd.f32 %v903, 2.0
          %v968 = vadd.f32 %v904, 2.0
          %v969 = vadd.f32 %v905, 2.0
          %v970 = vadd.f32 %v906, 2.0
          %v971 = vadd.f32 %v907, 2.0
          %v972 = vadd.f32 %v908, 2.0
          %v973 = vadd.f32 %v909, 2.0
          %v974 = vadd.f32 %v910, 2.0
          %v975 = vadd.f32 %v911, 2.0
          %v976 = vrcp.pop %v944
          %v977 = vrcp.pop %v945
          %v978 = vrcp.pop %v946
          %v979 = vrcp.pop %v947
          %v980 = vrcp.pop %v948
          %v981 = vrcp.pop %v949
          %v982 = vrcp.pop %v950
          %v983 = vrcp.pop %v951
          %v984 = vrcp.pop %v952
          %v985 = vrcp.pop %v953
          %v986 = vrcp.pop %v954
          %v987 = vrcp.pop %v955
          %v988 = vrcp.pop %v956
          %v989 = vrcp.pop %v957
          %v990 = vrcp.pop %v958
          %v991 = vrcp.pop %v959
          %v992 = vrcp.pop %v960
          %v993 = vrcp.pop %v961
          %v994 = vrcp.pop %v962
          %v995 = vrcp.pop %v963
          %v996 = vrcp.pop %v964
          %v997 = vrcp.pop %v965
          %v998 = vrcp.pop %v966
          %v999 = vrcp.pop %v967
          %v1000 = vrcp.pop %v968
          %v1001 = vrcp.pop %v969
          %v1002 = vrcp.pop %v970
          %v1003 = vrcp.pop %v971
          %v1004 = vrcp.pop %v972
          %v1005 = vrcp.pop %v973
          %v1006 = vrcp.pop %v974
          %v1007 = vrcp.pop %v975
          %v1008 = vmul.f32 %v912, %v976
          %v1009 = vmul.f32 %v913, %v977
          %v1010 = vmul.f32 %v914, %v978
          %v1011 = vmul.f32 %v915, %v979
          %v1012 = vmul.f32 %v916, %v980
          %v1013 = vmul.f32 %v917, %v981
          %v1014 = vmul.f32 %v918, %v982
          %v1015 = vmul.f32 %v919, %v983
          %v1016 = vmul.f32 %v920, %v984
          %v1017 = vmul.f32 %v921, %v985
          %v1018 = vmul.f32 %v922, %v986
          %v1019 = vmul.f32 %v923, %v987
          %v1020 = vmul.f32 %v924, %v988
          %v1021 = vmul.f32 %v925, %v989
          %v1022 = vmul.f32 %v926, %v990
          %v1023 = vmul.f32 %v927, %v991
          %v1024 = vmul.f32 %v928, %v992
          %v1025 = vmul.f32 %v929, %v993
          %v1026 = vmul.f32 %v930, %v994
          %v1027 = vmul.f32 %v931, %v995
          %v1028 = vmul.f32 %v932, %v996
          %v1029 = vmul.f32 %v933, %v997
          %v1030 = vmul.f32 %v934, %v998
          %v1031 = vmul.f32 %v935, %v999
          %v1032 = vmul.f32 %v936, %v1000
          %v1033 = vmul.f32 %v937, %v1001
          %v1034 = vmul.f32 %v938, %v1002
          %v1035 = vmul.f32 %v939, %v1003
          %v1036 = vmul.f32 %v940, %v1004
          %v1037 = vmul.f32 %v941, %v1005
          %v1038 = vmul.f32 %v942, %v1006
          %v1039 = vmul.f32 %v943, %v1007
          %v1040 = vpack.c.bf16 %v1010, %v1008
          %v1041 = vpack.c.bf16 %v1011, %v1009
          %v1042 = vpack.c.bf16 %v1014, %v1012
          %v1043 = vpack.c.bf16 %v1015, %v1013
          %v1044 = vpack.c.bf16 %v1018, %v1016
          %v1045 = vpack.c.bf16 %v1019, %v1017
          %v1046 = vpack.c.bf16 %v1022, %v1020
          %v1047 = vpack.c.bf16 %v1023, %v1021
          %v1048 = vpack.c.bf16 %v1026, %v1024
          %v1049 = vpack.c.bf16 %v1027, %v1025
          %v1050 = vpack.c.bf16 %v1030, %v1028
          %v1051 = vpack.c.bf16 %v1031, %v1029
          %v1052 = vpack.c.bf16 %v1034, %v1032
          %v1053 = vpack.c.bf16 %v1035, %v1033
          %v1054 = vpack.c.bf16 %v1038, %v1036
          %v1055 = vpack.c.bf16 %v1039, %v1037
          %v1072 = vunpack.c.l.b16 %v1040
          %v1073 = vunpack.c.l.b16 %v1041
          %v1074 = vunpack.c.h.b16 %v1040
          %v1075 = vunpack.c.h.b16 %v1041
          %v1076 = vunpack.c.l.b16 %v1042
          %v1077 = vunpack.c.l.b16 %v1043
          %v1078 = vunpack.c.h.b16 %v1042
          %v1079 = vunpack.c.h.b16 %v1043
          %v1080 = vunpack.c.l.b16 %v1044
          %v1081 = vunpack.c.l.b16 %v1045
          %v1082 = vunpack.c.h.b16 %v1044
          %v1083 = vunpack.c.h.b16 %v1045
          %v1084 = vunpack.c.l.b16 %v1046
          %v1085 = vunpack.c.l.b16 %v1047
          %v1086 = vunpack.c.h.b16 %v1046
          %v1087 = vunpack.c.h.b16 %v1047
          %v1088 = vunpack.c.l.b16 %v1048
          %v1089 = vunpack.c.l.b16 %v1049
          %v1090 = vunpack.c.h.b16 %v1048
          %v1091 = vunpack.c.h.b16 %v1049
          %v1092 = vunpack.c.l.b16 %v1050
          %v1093 = vunpack.c.l.b16 %v1051
          %v1094 = vunpack.c.h.b16 %v1050
          %v1095 = vunpack.c.h.b16 %v1051
          %v1096 = vunpack.c.l.b16 %v1052
          %v1097 = vunpack.c.l.b16 %v1053
          %v1098 = vunpack.c.h.b16 %v1052
          %v1099 = vunpack.c.h.b16 %v1053
          %v1100 = vunpack.c.l.b16 %v1054
          %v1101 = vunpack.c.l.b16 %v1055
          %v1102 = vunpack.c.h.b16 %v1054
          %v1103 = vunpack.c.h.b16 %v1055
          %v1104 = vpack.c.b16 %v1073, %v1072
          %v1105 = vpack.c.b16 %v1075, %v1074
          %v1106 = vpack.c.b16 %v1077, %v1076
          %v1107 = vpack.c.b16 %v1079, %v1078
          %v1108 = vpack.c.b16 %v1081, %v1080
          %v1109 = vpack.c.b16 %v1083, %v1082
          %v1110 = vpack.c.b16 %v1085, %v1084
          %v1111 = vpack.c.b16 %v1087, %v1086
          %v1112 = vpack.c.b16 %v1089, %v1088
          %v1113 = vpack.c.b16 %v1091, %v1090
          %v1114 = vpack.c.b16 %v1093, %v1092
          %v1115 = vpack.c.b16 %v1095, %v1094
          %v1116 = vpack.c.b16 %v1097, %v1096
          %v1117 = vpack.c.b16 %v1099, %v1098
          %v1118 = vpack.c.b16 %v1101, %v1100
          %v1119 = vpack.c.b16 %v1103, %v1102
          %1136 = vst [vmem:[%s262] sm:$0xff] %v1104
          %1137 = vst [vmem:[%s262 + $0x8] sm:$0xff] %v1105
          %1138 = vst [vmem:[%s262 + $0x10] sm:$0xff] %v1106
          %1139 = vst [vmem:[%s262 + $0x18] sm:$0xff] %v1107
          %1140 = vst [vmem:[%s262 + $0x20] sm:$0xff] %v1108
          %1141 = vst [vmem:[%s262 + $0x28] sm:$0xff] %v1109
          %1142 = vst [vmem:[%s262 + $0x30] sm:$0xff] %v1110
          %1143 = vst [vmem:[%s262 + $0x38] sm:$0xff] %v1111
          %1144 = vst [vmem:[%s262 + $0x40] sm:$0xff] %v1112
          %1145 = vst [vmem:[%s262 + $0x48] sm:$0xff] %v1113
          %1146 = vst [vmem:[%s262 + $0x50] sm:$0xff] %v1114
          %1147 = vst [vmem:[%s262 + $0x58] sm:$0xff] %v1115
          %1148 = vst [vmem:[%s262 + $0x60] sm:$0xff] %v1116
          %1149 = vst [vmem:[%s262 + $0x68] sm:$0xff] %v1117
          %1150 = vst [vmem:[%s262 + $0x70] sm:$0xff] %v1118
          %1151 = vst [vmem:[%s262 + $0x78] sm:$0xff] %v1119
        $region52: #{tpu_custom_call.1} parent=31 // pred_fallthru
          _
        %s1152 = sand.u32 %s121, 1
        %s1153 = scalar_lea.sflag [#allocation5], %s1152
        %s1154 = sand.u32 %s121, 1
        %s1155 = smul.addr %s1154, 128
        %s1156 = scalar_lea.vmem [#allocation9], %s1155
        // Predicated region
        $region53: #{tpu_custom_call.1} parent=31 // pred_check
          %p1157 = pneg %p131
        $region54: #{tpu_custom_call.1} parent=31 // pred_check_branch
          %1159 = sbr.rel (%p1157) target = $region56
        $region55: #{tpu_custom_call.1} parent=31 // pred_region
          %s1160 = smul.u32 2, %s25
          %s1162 = ssub.s32 2048, 2048
          %1163 = vsyncadd %s1153, %s1162
          %s1164 = smul.addr %s1160, 64
          %s1165 = scalar_lea.hbm %s3, %s1164
          %s1166 = sshll.u32 %s1156, 4
          %s1167 = int_to_ptr.vmem [resolvable:$true] %s1166
          %1172 = dma.vmem_to_hbm [thread:$0]  %s1167, 2048, %s1165, %s1153, 128, 512, 8
        $region56: #{tpu_custom_call.1} parent=31 // pred_fallthru
          _
      $region32: #{tpu_custom_call.1} parent=5 // pred_fallthru
        _
      %p1173 = scmp.le.s32.totalorder 2, %s16
      // Predicated region
      $region57: #{tpu_custom_call.1} parent=5 // pred_check
        %p1174 = pneg %p1173
      $region58: #{tpu_custom_call.1} parent=5 // pred_check_branch
        %1176 = sbr.rel (%p1174) target = $region60
      $region59: #{tpu_custom_call.1} parent=5 // pred_region
        %s1177 = ssub.s32 %s16, 2
        // Predicated region
        $region61: #{tpu_custom_call.1} parent=59 // pred_check
          %p1178 = pneg %p137
        $region62: #{tpu_custom_call.1} parent=59 // pred_check_branch
          %1180 = sbr.rel (%p1178) target = $region64
        $region63: #{tpu_custom_call.1} parent=59 // pred_region
          %s1181 = sand.u32 %s122, 1
          %s1182 = scalar_lea.sflag [#allocation5], %s1181
          %s1183 = sand.u32 %s122, 1
          %s1184 = smul.addr %s1183, 128
          %s1185 = scalar_lea.vmem [#allocation9], %s1184
          %1186 = dma.done %s1182, 2048
        $region64: #{tpu_custom_call.1} parent=59 // pred_fallthru
          _
      $region60: #{tpu_custom_call.1} parent=5 // pred_fallthru
        _
    $region6: #{tpu_custom_call.1} parent=1 // loop_footer
      %s20 = sadd.s32 1, %s16
    $region7: #{tpu_custom_call.1} parent=1 // loop_footer_branch
      %15 = sbr.rel target = $region3
    $region8: #{tpu_custom_call.1} parent=1 // loop_exit
      _
    %1187 = vsyncpa [#allocation4], 1
    %s1188 = scalar_lea.sflag [#allocation4], 1
    %1189 = vsyncpa %s1188, 1
    %1190 = vsyncpa [#allocation7], 1
    %s1191 = scalar_lea.sflag [#allocation7], 1
    %1192 = vsyncpa %s1191, 1
    %1193 = vsyncpa [#allocation5], 1
    %s1194 = scalar_lea.sflag [#allocation5], 1
    %1195 = vsyncpa %s1194, 1

</llo_original>
